<compile_context>
chip_gen: v5e
topology: v5e:2x2
jax: 0.10.0
libtpu: 0.0.40
codegen_flags: <defaults>
</compile_context>

<pallas_src>
import math

import jax
import jax.numpy as jnp
from jax.experimental import pallas as pl
from jax.experimental.pallas import tpu as pltpu


def _elementwise_kernel(x_ref, add_ref, sub_ref, mul_ref, div_ref, gt_ref, lt_ref):
    x = x_ref[...]
    add_ref[...] = x + 10.0
    sub_ref[...] = x - 5.0
    mul_ref[...] = x * 2.0
    div_ref[...] = x * 0.5          # bit-exact for /2 in f32
    gt_ref[...] = x > 5.0           # emitted directly as bool
    lt_ref[...] = x < 10.0          # emitted directly as bool


def _out_shapes(shape, dtype):
    f32 = jax.ShapeDtypeStruct(shape, dtype)
    msk = jax.ShapeDtypeStruct(shape, jnp.bool_)
    return (f32, f32, f32, f32, msk, msk)


def _cost(total):
    # Memory-bound hint for XLA: 4 B in + 4x4 B f32 out + 2x1 B bool out per element.
    return pl.CostEstimate(flops=6 * total, transcendentals=0,
                           bytes_accessed=(4 + 16 + 2) * total)


def pt_module_forward(x, *, tile_rows=2048):
    shape = x.shape
    dtype = x.dtype
    total = math.prod(shape)

    # ---------- small inputs: one whole-array block, no grid, no reshapes ----------
    if total <= tile_rows * 128:
        return pl.pallas_call(
            _elementwise_kernel,
            out_shape=_out_shapes(shape, dtype),
            cost_estimate=_cost(total),
        )(x)

    # ---------- large inputs: lane-dense 2D slab + 1D parallel grid ----------
    if shape[-1] % 128 == 0:
        # Layout-preserving collapse: lane (last) dim untouched, leading dims folded.
        lanes = shape[-1]
        rows = total // lanes
        pad = 0
        x2d = x.reshape(rows, lanes)
    else:
        # Relayout fallback: flatten to a (rows, 128) slab, padding only the tail lane-row.
        # TODO(synk): if callers can produce/consume this slab layout directly, the
        # reshape/relayout traffic around the kernel disappears entirely.
        lanes = 128
        rows = pl.cdiv(total, lanes)
        pad = rows * lanes - total
        xf = x.reshape(-1)
        if pad:
            xf = jnp.pad(xf, (0, pad))
        x2d = xf.reshape(rows, lanes)

    # Block rows: a multiple of 32 sublanes (valid tile for f32 and bool outputs),
    # sized to ~tile_rows*128 elements per block.
    block_rows = max(32, (tile_rows * 128 // lanes) // 32 * 32)
    if block_rows > rows:
        block_rows = rows           # a single full-extent block is always legal

    blk = pl.BlockSpec((block_rows, lanes), lambda i: (i, 0))
    outs = pl.pallas_call(
        _elementwise_kernel,
        out_shape=_out_shapes((rows, lanes), dtype),
        grid=(pl.cdiv(rows, block_rows),),   # partial final block handled by Pallas
        in_specs=[blk],
        out_specs=(blk,) * 6,
        compiler_params=pltpu.CompilerParams(
            dimension_semantics=("parallel",),   # megacore sharding on v7x
        ),
        cost_estimate=_cost(total),
    )(x2d)

    def unflatten(o):
        if pad:
            return o.reshape(-1)[:total].reshape(shape)
        return o.reshape(shape)

    return tuple(unflatten(o) for o in outs)


# Single jitted dispatch: collapses reshape/pad/slice + pallas_call into one executable.
pt_module_forward = jax.jit(pt_module_forward, static_argnames="tile_rows")


if __name__ == "__main__":
    key = jax.random.PRNGKey(0)
    # NCHW: batch=2, channels=4, spatial=16x16; scaled so both thresholds (5, 10) fire.
    x = jax.random.uniform(key, (2, 4, 16, 16), dtype=jnp.float32) * 15.0

    outs = pt_module_forward(x)
    outs = jax.block_until_ready(outs)

    add_r, sub_r, mul_r, div_r, gt_r, lt_r = outs
    assert jnp.allclose(add_r, x + 10.0)
    assert jnp.allclose(sub_r, x - 5.0)
    assert jnp.allclose(mul_r, x * 2.0)
    assert jnp.allclose(div_r, x / 2.0)
    assert jnp.array_equal(gt_r, x > 5.0)
    assert jnp.array_equal(lt_r, x < 10.0)
    assert gt_r.dtype == jnp.bool_ and lt_r.dtype == jnp.bool_
    assert add_r.shape == x.shape and gt_r.shape == x.shape

    print("KERNEL_OK")
</pallas_src>

<mosaic_0001>
module attributes {stable_mosaic.version = 11 : i64} {
  func.func @_elementwise_kernel(%arg0: memref<2x4x16x16xf32, #tpu.memory_space<vmem>>, %arg1: memref<2x4x16x16xf32, #tpu.memory_space<vmem>>, %arg2: memref<2x4x16x16xf32, #tpu.memory_space<vmem>>, %arg3: memref<2x4x16x16xf32, #tpu.memory_space<vmem>>, %arg4: memref<2x4x16x16xf32, #tpu.memory_space<vmem>>, %arg5: memref<2x4x16x16xi32, #tpu.memory_space<vmem>>, %arg6: memref<2x4x16x16xi32, #tpu.memory_space<vmem>>) attributes {dimension_semantics = [], scalar_prefetch = 0 : i64, scratch_operands = 0 : i64, tpu.core_type = #tpu.core_type<tc>} {
    %c0 = arith.constant 0 : index
    %c0_0 = arith.constant 0 : index
    %c0_1 = arith.constant 0 : index
    %c0_2 = arith.constant 0 : index
    %0 = vector.load %arg0[%c0, %c0_0, %c0_1, %c0_2] : memref<2x4x16x16xf32, #tpu.memory_space<vmem>>, vector<2x4x16x16xf32>
    %cst = arith.constant 1.000000e+01 : f32
    %1 = vector.broadcast %cst : f32 to vector<2x4x16x16xf32>
    %2 = arith.addf %0, %1 : vector<2x4x16x16xf32>
    %c0_3 = arith.constant 0 : index
    %c0_4 = arith.constant 0 : index
    %c0_5 = arith.constant 0 : index
    %c0_6 = arith.constant 0 : index
    %3 = vector.load %arg1[%c0_3, %c0_4, %c0_5, %c0_6] : memref<2x4x16x16xf32, #tpu.memory_space<vmem>>, vector<2x4x16x16xf32>
    tpu.vector_store %arg1[%c0_3, %c0_4, %c0_5, %c0_6], %2 {strides = array<i32>} : memref<2x4x16x16xf32, #tpu.memory_space<vmem>>, vector<2x4x16x16xf32>,
    %cst_7 = arith.constant 5.000000e+00 : f32
    %4 = vector.broadcast %cst_7 : f32 to vector<2x4x16x16xf32>
    %5 = arith.subf %0, %4 : vector<2x4x16x16xf32>
    %c0_8 = arith.constant 0 : index
    %c0_9 = arith.constant 0 : index
    %c0_10 = arith.constant 0 : index
    %c0_11 = arith.constant 0 : index
    %6 = vector.load %arg2[%c0_8, %c0_9, %c0_10, %c0_11] : memref<2x4x16x16xf32, #tpu.memory_space<vmem>>, vector<2x4x16x16xf32>
    tpu.vector_store %arg2[%c0_8, %c0_9, %c0_10, %c0_11], %5 {strides = array<i32>} : memref<2x4x16x16xf32, #tpu.memory_space<vmem>>, vector<2x4x16x16xf32>,
    %cst_12 = arith.constant 2.000000e+00 : f32
    %7 = vector.broadcast %cst_12 : f32 to vector<2x4x16x16xf32>
    %8 = arith.mulf %0, %7 : vector<2x4x16x16xf32>
    %c0_13 = arith.constant 0 : index
    %c0_14 = arith.constant 0 : index
    %c0_15 = arith.constant 0 : index
    %c0_16 = arith.constant 0 : index
    %9 = vector.load %arg3[%c0_13, %c0_14, %c0_15, %c0_16] : memref<2x4x16x16xf32, #tpu.memory_space<vmem>>, vector<2x4x16x16xf32>
    tpu.vector_store %arg3[%c0_13, %c0_14, %c0_15, %c0_16], %8 {strides = array<i32>} : memref<2x4x16x16xf32, #tpu.memory_space<vmem>>, vector<2x4x16x16xf32>,
    %cst_17 = arith.constant 5.000000e-01 : f32
    %10 = vector.broadcast %cst_17 : f32 to vector<2x4x16x16xf32>
    %11 = arith.mulf %0, %10 : vector<2x4x16x16xf32>
    %c0_18 = arith.constant 0 : index
    %c0_19 = arith.constant 0 : index
    %c0_20 = arith.constant 0 : index
    %c0_21 = arith.constant 0 : index
    %12 = vector.load %arg4[%c0_18, %c0_19, %c0_20, %c0_21] : memref<2x4x16x16xf32, #tpu.memory_space<vmem>>, vector<2x4x16x16xf32>
    tpu.vector_store %arg4[%c0_18, %c0_19, %c0_20, %c0_21], %11 {strides = array<i32>} : memref<2x4x16x16xf32, #tpu.memory_space<vmem>>, vector<2x4x16x16xf32>,
    %cst_22 = arith.constant 5.000000e+00 : f32
    %13 = vector.broadcast %cst_22 : f32 to vector<2x4x16x16xf32>
    %14 = arith.cmpf ogt, %0, %13 : vector<2x4x16x16xf32>
    %c0_23 = arith.constant 0 : index
    %c0_24 = arith.constant 0 : index
    %c0_25 = arith.constant 0 : index
    %c0_26 = arith.constant 0 : index
    %15 = vector.load %arg5[%c0_23, %c0_24, %c0_25, %c0_26] : memref<2x4x16x16xi32, #tpu.memory_space<vmem>>, vector<2x4x16x16xi32>
    %16 = arith.extui %14 : vector<2x4x16x16xi1> to vector<2x4x16x16xi32>
    %cst_27 = arith.constant dense<0> : vector<2x4x16x16xi32>
    %17 = arith.cmpi ne, %15, %cst_27 : vector<2x4x16x16xi32>
    tpu.vector_store %arg5[%c0_23, %c0_24, %c0_25, %c0_26], %16 {strides = array<i32>} : memref<2x4x16x16xi32, #tpu.memory_space<vmem>>, vector<2x4x16x16xi32>,
    %cst_28 = arith.constant 1.000000e+01 : f32
    %18 = vector.broadcast %cst_28 : f32 to vector<2x4x16x16xf32>
    %19 = arith.cmpf olt, %0, %18 : vector<2x4x16x16xf32>
    %c0_29 = arith.constant 0 : index
    %c0_30 = arith.constant 0 : index
    %c0_31 = arith.constant 0 : index
    %c0_32 = arith.constant 0 : index
    %20 = vector.load %arg6[%c0_29, %c0_30, %c0_31, %c0_32] : memref<2x4x16x16xi32, #tpu.memory_space<vmem>>, vector<2x4x16x16xi32>
    %21 = arith.extui %19 : vector<2x4x16x16xi1> to vector<2x4x16x16xi32>
    %cst_33 = arith.constant dense<0> : vector<2x4x16x16xi32>
    %22 = arith.cmpi ne, %20, %cst_33 : vector<2x4x16x16xi32>
    tpu.vector_store %arg6[%c0_29, %c0_30, %c0_31, %c0_32], %21 {strides = array<i32>} : memref<2x4x16x16xi32, #tpu.memory_space<vmem>>, vector<2x4x16x16xi32>,
    return
  }
}

</mosaic_0001>

<llo_original>
// kernel: pt_module_forward.1
$region0: #{pt_module_forward.1}
  #allocation0 [shape = 'u32[]', space=smem, size = 0x4, offset = 0x4, fixed_abs, tag = 'smem constant byte address 0x4 - core index']
  #allocation1 [shape = 'u32[72,128]{1,0:T(1,128)}', space=vmem, size = 0x9000, scoped, tag = 'internal scratch']
  %s0 = inlined_call_operand.hbm [shape: f32[2,4,16,16], index: 0, kind: input, shape index: {}]
  %s1 = inlined_call_operand.hbm [shape: f32[2,4,16,16], index: 1, kind: output, shape index: {0}]
  %s2 = inlined_call_operand.hbm [shape: f32[2,4,16,16], index: 2, kind: output, shape index: {1}]
  %s3 = inlined_call_operand.hbm [shape: f32[2,4,16,16], index: 3, kind: output, shape index: {2}]
  %s4 = inlined_call_operand.hbm [shape: f32[2,4,16,16], index: 4, kind: output, shape index: {3}]
  %s5 = inlined_call_operand.vmem [shape: s32[2,4,16,16], index: 5, kind: output, shape index: {4}]
  %s6 = inlined_call_operand.vmem [shape: s32[2,4,16,16], index: 6, kind: output, shape index: {5}]
  %7 = xla_tuple %s1, %s2, %s3, %s4, %s5, %s6
  %s8 = sld [smem:[#allocation0]]
  $region58: #{pt_module_forward.1} parent=0
    _
  %s10 = ssub.s32 1, %s8
  %s11 = scalar_select 0, %s10, %s8
  $region1: #{pt_module_forward.1} parent=0
    #allocation2 [shape = 'u8[65536]{0}', space=vmem, size = 0x10000, scoped, tag = 'input window, operand 0, single buffered']
    #allocation3 [shape = 's32[1]{0}', space=sflag, size = 0x4, scoped, tag = 'scoped memory for pt_module_forward.1']
    #allocation4 [shape = 's32[1]{0}', space=sflag, size = 0x4, scoped, tag = 'scoped memory for pt_module_forward.1']
    #allocation5 [shape = 'u8[65536]{0}', space=vmem, size = 0x10000, scoped, tag = 'output window, operand 0, single buffered']
    #allocation6 [shape = 'u8[65536]{0}', space=vmem, size = 0x10000, scoped, tag = 'output window, operand 1, single buffered']
    #allocation7 [shape = 's32[1]{0}', space=sflag, size = 0x4, scoped, tag = 'scoped memory for pt_module_forward.1']
    #allocation8 [shape = 'u8[65536]{0}', space=vmem, size = 0x10000, scoped, tag = 'output window, operand 2, single buffered']
    #allocation9 [shape = 'u8[65536]{0}', space=vmem, size = 0x10000, scoped, tag = 'output window, operand 3, single buffered']
    #allocation10 [shape = 's32[1]{0}', space=sflag, size = 0x4, scoped, tag = 'scoped memory for pt_module_forward.1']
    %12 = vsyncpa [#allocation3], 0
    %13 = vsyncpa [#allocation4], 0
    %14 = vsyncpa [#allocation7], 0
    %15 = vsyncpa [#allocation10], 0
    // Predicated region
    $region2: #{pt_module_forward.1} parent=1 // pred_check
      _
    $region3: #{pt_module_forward.1} parent=1 // pred_check_branch
      %17 = sbr.rel (0) target = $region5
    $region4: #{pt_module_forward.1} parent=1 // pred_region
      %19 = vsyncadd [#allocation3], 0
      %s20 = sshll.u32 %s0, 4
      %s21 = int_to_ptr.hbm [resolvable:$true] %s20
      %s22 = sshll.u32 [#allocation2], 4
      %s23 = int_to_ptr.vmem [resolvable:$true] %s22
      %28 = dma.hbm_to_vmem [thread:$0]  %s21, 2048, %s23, [#allocation3], 128, 128, 8
    $region5: #{pt_module_forward.1} parent=1 // pred_fallthru
      _
    // Predicated region
    $region6: #{pt_module_forward.1} parent=1 // pred_check
      _
    $region7: #{pt_module_forward.1} parent=1 // pred_check_branch
      %30 = sbr.rel (0) target = $region9
    $region8: #{pt_module_forward.1} parent=1 // pred_region
      %32 = dma.done [#allocation3], 2048
    $region9: #{pt_module_forward.1} parent=1 // pred_fallthru
      _
    %v33 = vld [vmem:[#allocation2] sm:$0xff]
    %v34 = vld [vmem:[#allocation2 + $0x8] sm:$0xff]
    %v35 = vld [vmem:[#allocation2 + $0x10] sm:$0xff]
    %v36 = vld [vmem:[#allocation2 + $0x18] sm:$0xff]
    %v37 = vld [vmem:[#allocation2 + $0x20] sm:$0xff]
    %v38 = vld [vmem:[#allocation2 + $0x28] sm:$0xff]
    %v39 = vld [vmem:[#allocation2 + $0x30] sm:$0xff]
    %v40 = vld [vmem:[#allocation2 + $0x38] sm:$0xff]
    %v41 = vld [vmem:[#allocation2 + $0x40] sm:$0xff]
    %v42 = vld [vmem:[#allocation2 + $0x48] sm:$0xff]
    %v43 = vld [vmem:[#allocation2 + $0x50] sm:$0xff]
    %v44 = vld [vmem:[#allocation2 + $0x58] sm:$0xff]
    %v45 = vld [vmem:[#allocation2 + $0x60] sm:$0xff]
    %v46 = vld [vmem:[#allocation2 + $0x68] sm:$0xff]
    %v47 = vld [vmem:[#allocation2 + $0x70] sm:$0xff]
    %v48 = vld [vmem:[#allocation2 + $0x78] sm:$0xff]
    %v49 = vadd.f32 %v33, 10.0
    %v50 = vadd.f32 %v34, 10.0
    %v51 = vadd.f32 %v35, 10.0
    %v52 = vadd.f32 %v36, 10.0
    %v53 = vadd.f32 %v37, 10.0
    %v54 = vadd.f32 %v38, 10.0
    %v55 = vadd.f32 %v39, 10.0
    %v56 = vadd.f32 %v40, 10.0
    %v57 = vadd.f32 %v41, 10.0
    %v58 = vadd.f32 %v42, 10.0
    %v59 = vadd.f32 %v43, 10.0
    %v60 = vadd.f32 %v44, 10.0
    %v61 = vadd.f32 %v45, 10.0
    %v62 = vadd.f32 %v46, 10.0
    %v63 = vadd.f32 %v47, 10.0
    %v64 = vadd.f32 %v48, 10.0
    %vm65 = vcmask 130048
    %66 = vst.msk [vmem:[#allocation5] sm:$0xff] %vm65, %v49
    %67 = vst.msk [vmem:[#allocation5 + $0x8] sm:$0xff] %vm65, %v50
    %68 = vst.msk [vmem:[#allocation5 + $0x10] sm:$0xff] %vm65, %v51
    %69 = vst.msk [vmem:[#allocation5 + $0x18] sm:$0xff] %vm65, %v52
    %70 = vst.msk [vmem:[#allocation5 + $0x20] sm:$0xff] %vm65, %v53
    %71 = vst.msk [vmem:[#allocation5 + $0x28] sm:$0xff] %vm65, %v54
    %72 = vst.msk [vmem:[#allocation5 + $0x30] sm:$0xff] %vm65, %v55
    %73 = vst.msk [vmem:[#allocation5 + $0x38] sm:$0xff] %vm65, %v56
    %74 = vst.msk [vmem:[#allocation5 + $0x40] sm:$0xff] %vm65, %v57
    %75 = vst.msk [vmem:[#allocation5 + $0x48] sm:$0xff] %vm65, %v58
    %76 = vst.msk [vmem:[#allocation5 + $0x50] sm:$0xff] %vm65, %v59
    %77 = vst.msk [vmem:[#allocation5 + $0x58] sm:$0xff] %vm65, %v60
    %78 = vst.msk [vmem:[#allocation5 + $0x60] sm:$0xff] %vm65, %v61
    %79 = vst.msk [vmem:[#allocation5 + $0x68] sm:$0xff] %vm65, %v62
    %80 = vst.msk [vmem:[#allocation5 + $0x70] sm:$0xff] %vm65, %v63
    %81 = vst.msk [vmem:[#allocation5 + $0x78] sm:$0xff] %vm65, %v64
    %v82 = vsub.f32 %v33, 5.0
    %v83 = vsub.f32 %v34, 5.0
    %v84 = vsub.f32 %v35, 5.0
    %v85 = vsub.f32 %v36, 5.0
    %v86 = vsub.f32 %v37, 5.0
    %v87 = vsub.f32 %v38, 5.0
    %v88 = vsub.f32 %v39, 5.0
    %v89 = vsub.f32 %v40, 5.0
    %v90 = vsub.f32 %v41, 5.0
    %v91 = vsub.f32 %v42, 5.0
    %v92 = vsub.f32 %v43, 5.0
    %v93 = vsub.f32 %v44, 5.0
    %v94 = vsub.f32 %v45, 5.0
    %v95 = vsub.f32 %v46, 5.0
    %v96 = vsub.f32 %v47, 5.0
    %v97 = vsub.f32 %v48, 5.0
    %98 = vst.msk [vmem:[#allocation6] sm:$0xff] %vm65, %v82
    %99 = vst.msk [vmem:[#allocation6 + $0x8] sm:$0xff] %vm65, %v83
    %100 = vst.msk [vmem:[#allocation6 + $0x10] sm:$0xff] %vm65, %v84
    %101 = vst.msk [vmem:[#allocation6 + $0x18] sm:$0xff] %vm65, %v85
    %102 = vst.msk [vmem:[#allocation6 + $0x20] sm:$0xff] %vm65, %v86
    %103 = vst.msk [vmem:[#allocation6 + $0x28] sm:$0xff] %vm65, %v87
    %104 = vst.msk [vmem:[#allocation6 + $0x30] sm:$0xff] %vm65, %v88
    %105 = vst.msk [vmem:[#allocation6 + $0x38] sm:$0xff] %vm65, %v89
    %106 = vst.msk [vmem:[#allocation6 + $0x40] sm:$0xff] %vm65, %v90
    %107 = vst.msk [vmem:[#allocation6 + $0x48] sm:$0xff] %vm65, %v91
    %108 = vst.msk [vmem:[#allocation6 + $0x50] sm:$0xff] %vm65, %v92
    %109 = vst.msk [vmem:[#allocation6 + $0x58] sm:$0xff] %vm65, %v93
    %110 = vst.msk [vmem:[#allocation6 + $0x60] sm:$0xff] %vm65, %v94
    %111 = vst.msk [vmem:[#allocation6 + $0x68] sm:$0xff] %vm65, %v95
    %112 = vst.msk [vmem:[#allocation6 + $0x70] sm:$0xff] %vm65, %v96
    %113 = vst.msk [vmem:[#allocation6 + $0x78] sm:$0xff] %vm65, %v97
    %v114 = vmul.f32 %v33, 2.0
    %v115 = vmul.f32 %v34, 2.0
    %v116 = vmul.f32 %v35, 2.0
    %v117 = vmul.f32 %v36, 2.0
    %v118 = vmul.f32 %v37, 2.0
    %v119 = vmul.f32 %v38, 2.0
    %v120 = vmul.f32 %v39, 2.0
    %v121 = vmul.f32 %v40, 2.0
    %v122 = vmul.f32 %v41, 2.0
    %v123 = vmul.f32 %v42, 2.0
    %v124 = vmul.f32 %v43, 2.0
    %v125 = vmul.f32 %v44, 2.0
    %v126 = vmul.f32 %v45, 2.0
    %v127 = vmul.f32 %v46, 2.0
    %v128 = vmul.f32 %v47, 2.0
    %v129 = vmul.f32 %v48, 2.0
    %130 = vst.msk [vmem:[#allocation8] sm:$0xff] %vm65, %v114
    %131 = vst.msk [vmem:[#allocation8 + $0x8] sm:$0xff] %vm65, %v115
    %132 = vst.msk [vmem:[#allocation8 + $0x10] sm:$0xff] %vm65, %v116
    %133 = vst.msk [vmem:[#allocation8 + $0x18] sm:$0xff] %vm65, %v117
    %134 = vst.msk [vmem:[#allocation8 + $0x20] sm:$0xff] %vm65, %v118
    %135 = vst.msk [vmem:[#allocation8 + $0x28] sm:$0xff] %vm65, %v119
    %136 = vst.msk [vmem:[#allocation8 + $0x30] sm:$0xff] %vm65, %v120
    %137 = vst.msk [vmem:[#allocation8 + $0x38] sm:$0xff] %vm65, %v121
    %138 = vst.msk [vmem:[#allocation8 + $0x40] sm:$0xff] %vm65, %v122
    %139 = vst.msk [vmem:[#allocation8 + $0x48] sm:$0xff] %vm65, %v123
    %140 = vst.msk [vmem:[#allocation8 + $0x50] sm:$0xff] %vm65, %v124
    %141 = vst.msk [vmem:[#allocation8 + $0x58] sm:$0xff] %vm65, %v125
    %142 = vst.msk [vmem:[#allocation8 + $0x60] sm:$0xff] %vm65, %v126
    %143 = vst.msk [vmem:[#allocation8 + $0x68] sm:$0xff] %vm65, %v127
    %144 = vst.msk [vmem:[#allocation8 + $0x70] sm:$0xff] %vm65, %v128
    %145 = vst.msk [vmem:[#allocation8 + $0x78] sm:$0xff] %vm65, %v129
    %v146 = vmul.f32 %v33, 0.5
    %v147 = vmul.f32 %v34, 0.5
    %v148 = vmul.f32 %v35, 0.5
    %v149 = vmul.f32 %v36, 0.5
    %v150 = vmul.f32 %v37, 0.5
    %v151 = vmul.f32 %v38, 0.5
    %v152 = vmul.f32 %v39, 0.5
    %v153 = vmul.f32 %v40, 0.5
    %v154 = vmul.f32 %v41, 0.5
    %v155 = vmul.f32 %v42, 0.5
    %v156 = vmul.f32 %v43, 0.5
    %v157 = vmul.f32 %v44, 0.5
    %v158 = vmul.f32 %v45, 0.5
    %v159 = vmul.f32 %v46, 0.5
    %v160 = vmul.f32 %v47, 0.5
    %v161 = vmul.f32 %v48, 0.5
    %162 = vst.msk [vmem:[#allocation9] sm:$0xff] %vm65, %v146
    %163 = vst.msk [vmem:[#allocation9 + $0x8] sm:$0xff] %vm65, %v147
    %164 = vst.msk [vmem:[#allocation9 + $0x10] sm:$0xff] %vm65, %v148
    %165 = vst.msk [vmem:[#allocation9 + $0x18] sm:$0xff] %vm65, %v149
    %166 = vst.msk [vmem:[#allocation9 + $0x20] sm:$0xff] %vm65, %v150
    %167 = vst.msk [vmem:[#allocation9 + $0x28] sm:$0xff] %vm65, %v151
    %168 = vst.msk [vmem:[#allocation9 + $0x30] sm:$0xff] %vm65, %v152
    %169 = vst.msk [vmem:[#allocation9 + $0x38] sm:$0xff] %vm65, %v153
    %170 = vst.msk [vmem:[#allocation9 + $0x40] sm:$0xff] %vm65, %v154
    %171 = vst.msk [vmem:[#allocation9 + $0x48] sm:$0xff] %vm65, %v155
    %172 = vst.msk [vmem:[#allocation9 + $0x50] sm:$0xff] %vm65, %v156
    %173 = vst.msk [vmem:[#allocation9 + $0x58] sm:$0xff] %vm65, %v157
    %174 = vst.msk [vmem:[#allocation9 + $0x60] sm:$0xff] %vm65, %v158
    %175 = vst.msk [vmem:[#allocation9 + $0x68] sm:$0xff] %vm65, %v159
    %176 = vst.msk [vmem:[#allocation9 + $0x70] sm:$0xff] %vm65, %v160
    %177 = vst.msk [vmem:[#allocation9 + $0x78] sm:$0xff] %vm65, %v161
    %vm178 = vcmp.gt.f32.partialorder %v33, 5.0
    %vm179 = vcmp.gt.f32.partialorder %v34, 5.0
    %vm180 = vcmp.gt.f32.partialorder %v35, 5.0
    %vm181 = vcmp.gt.f32.partialorder %v36, 5.0
    %vm182 = vcmp.gt.f32.partialorder %v37, 5.0
    %vm183 = vcmp.gt.f32.partialorder %v38, 5.0
    %vm184 = vcmp.gt.f32.partialorder %v39, 5.0
    %vm185 = vcmp.gt.f32.partialorder %v40, 5.0
    %vm186 = vcmp.gt.f32.partialorder %v41, 5.0
    %vm187 = vcmp.gt.f32.partialorder %v42, 5.0
    %vm188 = vcmp.gt.f32.partialorder %v43, 5.0
    %vm189 = vcmp.gt.f32.partialorder %v44, 5.0
    %vm190 = vcmp.gt.f32.partialorder %v45, 5.0
    %vm191 = vcmp.gt.f32.partialorder %v46, 5.0
    %vm192 = vcmp.gt.f32.partialorder %v47, 5.0
    %vm193 = vcmp.gt.f32.partialorder %v48, 5.0
    %v194 = vsel %vm178, 1, 0
    %v195 = vsel %vm179, 1, 0
    %v196 = vsel %vm180, 1, 0
    %v197 = vsel %vm181, 1, 0
    %v198 = vsel %vm182, 1, 0
    %v199 = vsel %vm183, 1, 0
    %v200 = vsel %vm184, 1, 0
    %v201 = vsel %vm185, 1, 0
    %v202 = vsel %vm186, 1, 0
    %v203 = vsel %vm187, 1, 0
    %v204 = vsel %vm188, 1, 0
    %v205 = vsel %vm189, 1, 0
    %v206 = vsel %vm190, 1, 0
    %v207 = vsel %vm191, 1, 0
    %v208 = vsel %vm192, 1, 0
    %v209 = vsel %vm193, 1, 0
    %210 = vst.msk [vmem:[%s5] sm:$0xff] %vm65, %v194
    %211 = vst.msk [vmem:[%s5 + $0x8] sm:$0xff] %vm65, %v195
    %212 = vst.msk [vmem:[%s5 + $0x10] sm:$0xff] %vm65, %v196
    %213 = vst.msk [vmem:[%s5 + $0x18] sm:$0xff] %vm65, %v197
    %214 = vst.msk [vmem:[%s5 + $0x20] sm:$0xff] %vm65, %v198
    %215 = vst.msk [vmem:[%s5 + $0x28] sm:$0xff] %vm65, %v199
    %216 = vst.msk [vmem:[%s5 + $0x30] sm:$0xff] %vm65, %v200
    %217 = vst.msk [vmem:[%s5 + $0x38] sm:$0xff] %vm65, %v201
    %218 = vst.msk [vmem:[%s5 + $0x40] sm:$0xff] %vm65, %v202
    %219 = vst.msk [vmem:[%s5 + $0x48] sm:$0xff] %vm65, %v203
    %220 = vst.msk [vmem:[%s5 + $0x50] sm:$0xff] %vm65, %v204
    %221 = vst.msk [vmem:[%s5 + $0x58] sm:$0xff] %vm65, %v205
    %222 = vst.msk [vmem:[%s5 + $0x60] sm:$0xff] %vm65, %v206
    %223 = vst.msk [vmem:[%s5 + $0x68] sm:$0xff] %vm65, %v207
    %224 = vst.msk [vmem:[%s5 + $0x70] sm:$0xff] %vm65, %v208
    %225 = vst.msk [vmem:[%s5 + $0x78] sm:$0xff] %vm65, %v209
    %vm226 = vcmp.lt.f32.partialorder %v33, 10.0
    %vm227 = vcmp.lt.f32.partialorder %v34, 10.0
    %vm228 = vcmp.lt.f32.partialorder %v35, 10.0
    %vm229 = vcmp.lt.f32.partialorder %v36, 10.0
    %vm230 = vcmp.lt.f32.partialorder %v37, 10.0
    %vm231 = vcmp.lt.f32.partialorder %v38, 10.0
    %vm232 = vcmp.lt.f32.partialorder %v39, 10.0
    %vm233 = vcmp.lt.f32.partialorder %v40, 10.0
    %vm234 = vcmp.lt.f32.partialorder %v41, 10.0
    %vm235 = vcmp.lt.f32.partialorder %v42, 10.0
    %vm236 = vcmp.lt.f32.partialorder %v43, 10.0
    %vm237 = vcmp.lt.f32.partialorder %v44, 10.0
    %vm238 = vcmp.lt.f32.partialorder %v45, 10.0
    %vm239 = vcmp.lt.f32.partialorder %v46, 10.0
    %vm240 = vcmp.lt.f32.partialorder %v47, 10.0
    %vm241 = vcmp.lt.f32.partialorder %v48, 10.0
    %v242 = vsel %vm226, 1, 0
    %v243 = vsel %vm227, 1, 0
    %v244 = vsel %vm228, 1, 0
    %v245 = vsel %vm229, 1, 0
    %v246 = vsel %vm230, 1, 0
    %v247 = vsel %vm231, 1, 0
    %v248 = vsel %vm232, 1, 0
    %v249 = vsel %vm233, 1, 0
    %v250 = vsel %vm234, 1, 0
    %v251 = vsel %vm235, 1, 0
    %v252 = vsel %vm236, 1, 0
    %v253 = vsel %vm237, 1, 0
    %v254 = vsel %vm238, 1, 0
    %v255 = vsel %vm239, 1, 0
    %v256 = vsel %vm240, 1, 0
    %v257 = vsel %vm241, 1, 0
    %258 = vst.msk [vmem:[%s6] sm:$0xff] %vm65, %v242
    %259 = vst.msk [vmem:[%s6 + $0x8] sm:$0xff] %vm65, %v243
    %260 = vst.msk [vmem:[%s6 + $0x10] sm:$0xff] %vm65, %v244
    %261 = vst.msk [vmem:[%s6 + $0x18] sm:$0xff] %vm65, %v245
    %262 = vst.msk [vmem:[%s6 + $0x20] sm:$0xff] %vm65, %v246
    %263 = vst.msk [vmem:[%s6 + $0x28] sm:$0xff] %vm65, %v247
    %264 = vst.msk [vmem:[%s6 + $0x30] sm:$0xff] %vm65, %v248
    %265 = vst.msk [vmem:[%s6 + $0x38] sm:$0xff] %vm65, %v249
    %266 = vst.msk [vmem:[%s6 + $0x40] sm:$0xff] %vm65, %v250
    %267 = vst.msk [vmem:[%s6 + $0x48] sm:$0xff] %vm65, %v251
    %268 = vst.msk [vmem:[%s6 + $0x50] sm:$0xff] %vm65, %v252
    %269 = vst.msk [vmem:[%s6 + $0x58] sm:$0xff] %vm65, %v253
    %270 = vst.msk [vmem:[%s6 + $0x60] sm:$0xff] %vm65, %v254
    %271 = vst.msk [vmem:[%s6 + $0x68] sm:$0xff] %vm65, %v255
    %272 = vst.msk [vmem:[%s6 + $0x70] sm:$0xff] %vm65, %v256
    %273 = vst.msk [vmem:[%s6 + $0x78] sm:$0xff] %vm65, %v257
    // Predicated region
    $region10: #{pt_module_forward.1} parent=1 // pred_check
      _
    $region11: #{pt_module_forward.1} parent=1 // pred_check_branch
      %275 = sbr.rel (0) target = $region13
    $region12: #{pt_module_forward.1} parent=1 // pred_region
      %277 = vsyncadd [#allocation4], 0
      %s278 = sshll.u32 [#allocation5], 4
      %s279 = int_to_ptr.vmem [resolvable:$true] %s278
      %s280 = sshll.u32 %s1, 4
      %s281 = int_to_ptr.hbm [resolvable:$true] %s280
      %286 = dma.vmem_to_hbm [thread:$0]  %s279, 2048, %s281, [#allocation4], 128, 128, 8
    $region13: #{pt_module_forward.1} parent=1 // pred_fallthru
      _
    // Predicated region
    $region14: #{pt_module_forward.1} parent=1 // pred_check
      _
    $region15: #{pt_module_forward.1} parent=1 // pred_check_branch
      %288 = sbr.rel (0) target = $region17
    $region16: #{pt_module_forward.1} parent=1 // pred_region
      %290 = vsyncadd [#allocation7], 0
      %s291 = sshll.u32 [#allocation6], 4
      %s292 = int_to_ptr.vmem [resolvable:$true] %s291
      %s293 = sshll.u32 %s2, 4
      %s294 = int_to_ptr.hbm [resolvable:$true] %s293
      %299 = dma.vmem_to_hbm [thread:$0]  %s292, 2048, %s294, [#allocation7], 128, 128, 8
    $region17: #{pt_module_forward.1} parent=1 // pred_fallthru
      _
    // Predicated region
    $region18: #{pt_module_forward.1} parent=1 // pred_check
      _
    $region19: #{pt_module_forward.1} parent=1 // pred_check_branch
      %301 = sbr.rel (0) target = $region21
    $region20: #{pt_module_forward.1} parent=1 // pred_region
      %303 = vsyncadd [#allocation7], 0
      %s304 = sshll.u32 [#allocation8], 4
      %s305 = int_to_ptr.vmem [resolvable:$true] %s304
      %s306 = sshll.u32 %s3, 4
      %s307 = int_to_ptr.hbm [resolvable:$true] %s306
      %312 = dma.vmem_to_hbm [thread:$0]  %s305, 2048, %s307, [#allocation7], 128, 128, 8
    $region21: #{pt_module_forward.1} parent=1 // pred_fallthru
      _
    // Predicated region
    $region22: #{pt_module_forward.1} parent=1 // pred_check
      _
    $region23: #{pt_module_forward.1} parent=1 // pred_check_branch
      %314 = sbr.rel (0) target = $region25
    $region24: #{pt_module_forward.1} parent=1 // pred_region
      %316 = vsyncadd [#allocation10], 0
      %s317 = sshll.u32 [#allocation9], 4
      %s318 = int_to_ptr.vmem [resolvable:$true] %s317
      %s319 = sshll.u32 %s4, 4
      %s320 = int_to_ptr.hbm [resolvable:$true] %s319
      %325 = dma.vmem_to_hbm [thread:$0]  %s318, 2048, %s320, [#allocation10], 128, 128, 8
    $region25: #{pt_module_forward.1} parent=1 // pred_fallthru
      _
    // Predicated region
    $region26: #{pt_module_forward.1} parent=1 // pred_check
      _
    $region27: #{pt_module_forward.1} parent=1 // pred_check_branch
      %327 = sbr.rel (0) target = $region29
    $region28: #{pt_module_forward.1} parent=1 // pred_region
      _
    $region29: #{pt_module_forward.1} parent=1 // pred_fallthru
      _
    // Predicated region
    $region30: #{pt_module_forward.1} parent=1 // pred_check
      _
    $region31: #{pt_module_forward.1} parent=1 // pred_check_branch
      %329 = sbr.rel (0) target = $region33
    $region32: #{pt_module_forward.1} parent=1 // pred_region
      _
    $region33: #{pt_module_forward.1} parent=1 // pred_fallthru
      _
    // Predicated region
    $region34: #{pt_module_forward.1} parent=1 // pred_check
      _
    $region35: #{pt_module_forward.1} parent=1 // pred_check_branch
      %331 = sbr.rel (0) target = $region37
    $region36: #{pt_module_forward.1} parent=1 // pred_region
      %333 = dma.done [#allocation4], 2048
    $region37: #{pt_module_forward.1} parent=1 // pred_fallthru
      _
    // Predicated region
    $region38: #{pt_module_forward.1} parent=1 // pred_check
      _
    $region39: #{pt_module_forward.1} parent=1 // pred_check_branch
      %335 = sbr.rel (0) target = $region41
    $region40: #{pt_module_forward.1} parent=1 // pred_region
      %337 = dma.done [#allocation7], 2048
    $region41: #{pt_module_forward.1} parent=1 // pred_fallthru
      _
    // Predicated region
    $region42: #{pt_module_forward.1} parent=1 // pred_check
      _
    $region43: #{pt_module_forward.1} parent=1 // pred_check_branch
      %339 = sbr.rel (0) target = $region45
    $region44: #{pt_module_forward.1} parent=1 // pred_region
      %341 = dma.done [#allocation7], 2048
    $region45: #{pt_module_forward.1} parent=1 // pred_fallthru
      _
    // Predicated region
    $region46: #{pt_module_forward.1} parent=1 // pred_check
      _
    $region47: #{pt_module_forward.1} parent=1 // pred_check_branch
      %343 = sbr.rel (0) target = $region49
    $region48: #{pt_module_forward.1} parent=1 // pred_region
      %345 = dma.done [#allocation10], 2048
    $region49: #{pt_module_forward.1} parent=1 // pred_fallthru
      _
    // Predicated region
    $region50: #{pt_module_forward.1} parent=1 // pred_check
      _
    $region51: #{pt_module_forward.1} parent=1 // pred_check_branch
      %347 = sbr.rel (0) target = $region53
    $region52: #{pt_module_forward.1} parent=1 // pred_region
      _
    $region53: #{pt_module_forward.1} parent=1 // pred_fallthru
      _
    // Predicated region
    $region54: #{pt_module_forward.1} parent=1 // pred_check
      _
    $region55: #{pt_module_forward.1} parent=1 // pred_check_branch
      %349 = sbr.rel (0) target = $region57
    $region56: #{pt_module_forward.1} parent=1 // pred_region
      _
    $region57: #{pt_module_forward.1} parent=1 // pred_fallthru
      _
    %350 = vsyncpa [#allocation3], 1
    %351 = vsyncpa [#allocation4], 1
    %352 = vsyncpa [#allocation7], 1
    %353 = vsyncpa [#allocation10], 1

</llo_original>
